<compile_context>
chip_gen: v5e
topology: v5e:2x2
jax: 0.10.0
libtpu: 0.0.40
codegen_flags: <defaults>
</compile_context>

<pallas_src>
import math

import jax
import jax.numpy as jnp
from jax.experimental import pallas as pl
from jax.experimental.pallas import tpu as pltpu


# ----------------------------------------------------------------------------
# Kernel: one row-tile of  out = x @ w + b  (f32 accumulation on the MXU).
# ----------------------------------------------------------------------------
def _linear_kernel(x_ref, w_ref, b_ref, o_ref):
    # x:(TM,K)  w:(K,N)  b:(1,N)  ->  o:(TM,N)
    # Contract x's lane axis against w's sublane axis: natural [M,K]x[K,N] MXU
    # feed, no in-body weight relayout, no full-tile upcast (bf16 ok).
    acc = jax.lax.dot_general(
        x_ref[...], w_ref[...],
        dimension_numbers=(((1,), (0,)), ((), ())),
        preferred_element_type=jnp.float32)
    o_ref[...] = (acc + b_ref[...].astype(jnp.float32)).astype(o_ref.dtype)


# ----------------------------------------------------------------------------
# Tile-size selection.
# ----------------------------------------------------------------------------
def _round_up(a, b):
    return -(-a // b) * b


def _sublane(dtype):
    # Min second-minor tile per dtype: 8 (4B), 16 (2B), 32 (1B).
    return {4: 8, 2: 16, 1: 32}.get(jnp.dtype(dtype).itemsize, 8)


def _hw_params():
    """(per-step x-tile HBM-byte target, VMEM budget for pipelined tiles).

    v7x-class parts have ~2.4x the HBM bandwidth of v6e (per-step overhead
    costs more bytes) but only 64 MiB physical VMEM; v5e's scoped-VMEM default
    is 16 MiB.  Detected via get_tpu_info, with conservative fallbacks.
    """
    target, budget = 2 << 20, 12 << 20          # safe under v5e's 16 MiB scoped default
    try:
        vmem = pltpu.get_tpu_info().vmem_capacity_bytes
        if vmem <= (64 << 20):                  # v7x-class (64 MiB VMEM, ~3.2 TB/s HBM)
            target, budget = 4 << 20, 20 << 20
        else:                                   # v5e / v6e (128 MiB VMEM)
            target, budget = 2 << 20, 12 << 20
    except Exception:
        pass
    return target, budget


def _choose_tm(rows, k_width, n_width, dtype, *, target_x_bytes=None, vmem_budget=None):
    """Largest row tile that (a) moves ~target_x_bytes of x per grid step,
    (b) keeps double-buffered lane-padded x+out tiles plus weight/bias inside
    the VMEM budget, and (c) leaves the 'parallel' grid axis with >= 2 steps."""
    itemsize = jnp.dtype(dtype).itemsize
    sub = _sublane(dtype)
    hw_target, hw_budget = _hw_params()
    target_x_bytes = target_x_bytes or hw_target
    vmem_budget = vmem_budget or hw_budget

    k_pad = _round_up(k_width, 128)             # lane-padded VMEM width of x
    n_pad = _round_up(n_width, 128)             # lane-padded VMEM width of out
    # Resident weight + bias (assume Pallas double-buffers them too).
    fixed = 2 * (k_pad * n_pad + n_pad) * itemsize
    # Per-row VMEM: double-buffered x tile + double-buffered out tile.
    per_row = 2 * (k_pad + n_pad) * itemsize

    tm_vmem = max(sub, (vmem_budget - fixed) // per_row)
    tm_hbm = max(sub, target_x_bytes // (k_pad * itemsize))
    tm = min(tm_vmem, tm_hbm)

    # Keep >= 2 grid steps so both v7x TensorCores get work on the parallel axis.
    half = max(_round_up(-(-rows // 2), sub), sub)
    tm = min(tm, half)

    tm = max((tm // sub) * sub, sub)
    tm = min(tm, _round_up(rows, sub))
    return int(tm)


# ----------------------------------------------------------------------------
# pallas_call builder for a 2-D  (rows, K) @ (K, N) + (1, N)  linear.
# ----------------------------------------------------------------------------
def _linear_pallas(x2d, w_kn, b_1n, *, tm=None):
    rows, k = x2d.shape
    k_w, n = w_kn.shape
    assert k == k_w and b_1n.shape == (1, n)

    if tm is None:
        tm = _choose_tm(rows, k, n, x2d.dtype)
    grid = (pl.cdiv(rows, tm),)

    x_bytes = jnp.dtype(x2d.dtype).itemsize
    cost = pl.CostEstimate(
        flops=2 * rows * k * n,
        transcendentals=0,
        bytes_accessed=(rows * k * x_bytes
                        + k * n * jnp.dtype(w_kn.dtype).itemsize
                        + rows * n * x_bytes),
    )

    return pl.pallas_call(
        _linear_kernel,
        out_shape=jax.ShapeDtypeStruct((rows, n), x2d.dtype),
        grid=grid,
        in_specs=[
            pl.BlockSpec((tm, k), lambda i: (i, 0)),   # x tile: pipelined (double-buffered)
            pl.BlockSpec((k, n), lambda i: (0, 0)),    # weight: resident in VMEM
            pl.BlockSpec((1, n), lambda i: (0, 0)),    # bias:   resident in VMEM
        ],
        out_specs=pl.BlockSpec((tm, n), lambda i: (i, 0)),
        compiler_params=pltpu.CompilerParams(dimension_semantics=("parallel",)),
        cost_estimate=cost,
    )(x2d, w_kn, b_1n)


# ----------------------------------------------------------------------------
# TimeLogModel forward: x @ weight.T + bias on the last dim.
# ----------------------------------------------------------------------------
def time_log_model(x, weight, bias, *, tm=None):
    """x: [..., hidden], weight: [time_size, hidden] (PyTorch layout),
    bias: [time_size]  ->  [..., time_size]."""
    *lead, hidden = x.shape
    time_size, hidden_w = weight.shape
    assert hidden == hidden_w and bias.shape == (time_size,)

    rows = math.prod(lead) if lead else 1
    x2d = x.reshape(rows, hidden)
    sub = _sublane(x.dtype)

    # Lane-packed GEMV path: time_size == 1 and hidden < 128 (and divides 128).
    g = 128 // hidden if (hidden < 128 and 128 % hidden == 0) else 1
    use_packed = (time_size == 1 and g > 1
                  and rows % g == 0 and (rows // g) >= sub)

    if use_packed:
        # Pack G consecutive rows into one 128-lane-dense row (free, contiguous).
        x_packed = x2d.reshape(rows // g, g * hidden)
        # Block-diagonal (G*hidden, G) weight: column j holds w in segment j.
        w_bd = jnp.kron(jnp.eye(g, dtype=weight.dtype), weight.reshape(hidden, 1))
        b_packed = jnp.tile(bias.reshape(1, 1), (1, g))
        out_p = _linear_pallas(x_packed, w_bd, b_packed, tm=tm)   # (rows/G, G)
        out2d = out_p.reshape(rows, 1)                            # row-major unpack
    else:
        # General path: weight pre-transposed once in the wrapper (no per-step
        # in-kernel relayout of the resident weight).
        out2d = _linear_pallas(x2d, weight.T, bias.reshape(1, time_size), tm=tm)

    return out2d.reshape(*lead, time_size)


# ----------------------------------------------------------------------------
# Demo / correctness check.
# ----------------------------------------------------------------------------
if __name__ == "__main__":
    hidden = 32
    key = jax.random.PRNGKey(0)
    kx1, kx2, kw, kb, kw2, kb2 = jax.random.split(key, 6)
    bound = 1.0 / (hidden ** 0.5)

    # Case 1: batch=2, seq=8, hidden=32, time_size=1 (small-rows general path).
    x1 = jax.random.normal(kx1, (2, 8, hidden), dtype=jnp.float32)
    weight = jax.random.uniform(kw, (1, hidden), jnp.float32, -bound, bound)
    bias = jax.random.uniform(kb, (1,), jnp.float32, -bound, bound)
    out1 = jax.block_until_ready(time_log_model(x1, weight, bias))
    ref1 = x1 @ weight.T + bias
    assert out1.shape == (2, 8, 1)
    assert jnp.allclose(out1, ref1, atol=1e-5, rtol=1e-5)

    # Case 2: batch=2, seq=16 -> rows=32 exercises the lane-packed GEMV path.
    x2 = jax.random.normal(kx2, (2, 16, hidden), dtype=jnp.float32)
    out2 = jax.block_until_ready(time_log_model(x2, weight, bias))
    ref2 = x2 @ weight.T + bias
    assert out2.shape == (2, 16, 1)
    assert jnp.allclose(out2, ref2, atol=1e-5, rtol=1e-5)

    # Case 3: time_size=4 exercises the general pre-transposed-weight path.
    ts = 4
    weight2 = jax.random.uniform(kw2, (ts, hidden), jnp.float32, -bound, bound)
    bias2 = jax.random.uniform(kb2, (ts,), jnp.float32, -bound, bound)
    out3 = jax.block_until_ready(time_log_model(x1, weight2, bias2))
    ref3 = x1 @ weight2.T + bias2
    assert out3.shape == (2, 8, ts)
    assert jnp.allclose(out3, ref3, atol=1e-5, rtol=1e-5)

    print("KERNEL_OK")
</pallas_src>

<mosaic_0001>
module attributes {stable_mosaic.version = 11 : i64} {
  func.func @_linear_kernel(%arg0: i32, %arg1: memref<8x32xf32, #tpu.memory_space<vmem>>, %arg2: memref<32x1xf32, #tpu.memory_space<vmem>>, %arg3: memref<1x1xf32, #tpu.memory_space<vmem>>, %arg4: memref<8x1xf32, #tpu.memory_space<vmem>>) attributes {dimension_semantics = [#tpu.dimension_semantics<parallel>], iteration_bounds = array<i64: 2>, scalar_prefetch = 0 : i64, scratch_operands = 0 : i64, tpu.core_type = #tpu.core_type<tc>, window_params = [{transform_indices = @transform_0, window_bounds = array<i64: 8, 32>}, {pipeline_mode = #tpu.pipeline_mode<synchronous>, transform_indices = @transform_1, window_bounds = array<i64: 32, 1>}, {pipeline_mode = #tpu.pipeline_mode<synchronous>, transform_indices = @transform_2, window_bounds = array<i64: 1, 1>}, {transform_indices = @transform_3, window_bounds = array<i64: 8, 1>}]} {
    %c0 = arith.constant 0 : index
    %c0_0 = arith.constant 0 : index
    %0 = vector.load %arg1[%c0, %c0_0] : memref<8x32xf32, #tpu.memory_space<vmem>>, vector<8x32xf32>
    %c0_1 = arith.constant 0 : index
    %c0_2 = arith.constant 0 : index
    %1 = vector.load %arg2[%c0_1, %c0_2] : memref<32x1xf32, #tpu.memory_space<vmem>>, vector<32x1xf32>
    %cst = arith.constant dense<0.000000e+00> : vector<8x1xf32>
    %2 = tpu.matmul %0, %1, %cst {dimension_numbers = #tpu.dot_dimension_numbers<[1], [0], [0], [1], [0, 0, 1, 1], [], []>} : vector<8x32xf32>, vector<32x1xf32>, vector<8x1xf32> -> vector<8x1xf32>
    %c0_3 = arith.constant 0 : index
    %c0_4 = arith.constant 0 : index
    %3 = vector.load %arg3[%c0_3, %c0_4] : memref<1x1xf32, #tpu.memory_space<vmem>>, vector<1x1xf32>
    %4 = vector.broadcast %3 : vector<1x1xf32> to vector<8x1xf32>
    %5 = arith.addf %2, %4 : vector<8x1xf32>
    %c0_5 = arith.constant 0 : index
    %c0_6 = arith.constant 0 : index
    %6 = vector.load %arg4[%c0_5, %c0_6] : memref<8x1xf32, #tpu.memory_space<vmem>>, vector<8x1xf32>
    tpu.vector_store %arg4[%c0_5, %c0_6], %5 {strides = array<i32>} : memref<8x1xf32, #tpu.memory_space<vmem>>, vector<8x1xf32>,
    return
  }
  func.func @transform_0(%arg0: i32) -> (i32, i32) {
    %c0_i32 = arith.constant 0 : i32
    %c0_i32_0 = arith.constant 0 : i32
    return %arg0, %c0_i32 : i32, i32
  }
  func.func @transform_1(%arg0: i32) -> (i32, i32) {
    %c0_i32 = arith.constant 0 : i32
    %c0_i32_0 = arith.constant 0 : i32
    %c0_i32_1 = arith.constant 0 : i32
    return %c0_i32, %c0_i32_0 : i32, i32
  }
  func.func @transform_2(%arg0: i32) -> (i32, i32) {
    %c0_i32 = arith.constant 0 : i32
    %c0_i32_0 = arith.constant 0 : i32
    %c0_i32_1 = arith.constant 0 : i32
    return %c0_i32, %c0_i32_0 : i32, i32
  }
  func.func @transform_3(%arg0: i32) -> (i32, i32) {
    %c0_i32 = arith.constant 0 : i32
    %c0_i32_0 = arith.constant 0 : i32
    return %arg0, %c0_i32 : i32, i32
  }
}

</mosaic_0001>

<llo_original>
// kernel: tpu_custom_call.1
$region0: #{tpu_custom_call.1}
  #allocation0 [shape = 'u32[]', space=smem, size = 0x4, offset = 0x4, fixed_abs, tag = 'smem constant byte address 0x4 - core index']
  #allocation1 [shape = 'u32[72,128]{1,0:T(1,128)}', space=vmem, size = 0x9000, scoped, tag = 'internal scratch']
  #allocation2 [shape = 'f32[1,1]{1,0:T(1,128)S(1)}', space=vmem, size = 0x200, scoped, tag = 'scoped memory for tpu_custom_call.1']
  %s0 = inlined_call_operand.vmem [shape: f32[16,32], index: 0, kind: input, shape index: {}]
  %s1 = inlined_call_operand.vmem [shape: f32[32,1], index: 1, kind: input, shape index: {}]
  %s2 = inlined_call_operand.<no memory space> [shape: f32[1,1], index: 2, kind: input, shape index: {}]
  %s3 = inlined_call_operand.vmem [shape: f32[16,1], index: 3, kind: output, shape index: {}]
  %s4 = sld [smem:[#allocation0]]
  $region45: #{tpu_custom_call.1} parent=0
    _
  %s6 = ssub.s32 1, %s4
  %s7 = scalar_select 0, %s6, %s4
  %v8 = vstv %s2
  %9 = vst [vmem:[#allocation2] sm:$0x1] %v8
  loop: start=0, step=1, limit=4
  $region2: #{tpu_custom_call.1} parent=0 // loop_pre_header
    _
  $region3: #{tpu_custom_call.1} parent=0 // loop_header
    %s11 = sphi 0, %s15
    %p12 = scmp.ge.s32.totalorder %s11, 4
    %s21 = sphi 0, %s23
    %s24 = sphi 0, %s21
    %s25 = sphi 0, %s24
    %s41 = sphi 0, %s25
    %s45 = sphi 0, %s45
    %s47 = sphi 0, %s45
    %s48 = sphi 0, %s47
    %s62 = sphi 0, %s48
    %s66 = sphi 0, %s66
    %s68 = sphi 0, %s66
    %s69 = sphi 0, %s68
    %s83 = sphi 0, %s69
    %s89 = sphi 0, %s91
    %s92 = sphi 0, %s89
    %s93 = sphi 0, %s92
    %s109 = sphi 0, %s93
  $region4: #{tpu_custom_call.1} parent=0 // loop_header_branch
    %14 = sbr.rel (%p12) target = $region8
  $region5: #{tpu_custom_call.1} parent=0 // loop_body
    %s16 = ssub.s32 %s11, 1
    %s17 = ssub.s32 %s11, 2
    %s18 = sadd.s32 %s11, 1
    %s19 = ssub.s32 %s11, %s18
    %p20 = scmp.eq.s32.totalorder %s19, 0
    %s22 = sadd.s32 %s21, 1
    %s23 = scalar_select %p20, %s21, %s22
    %p26 = pneg %p20
    %p27 = scmp.eq.s32.totalorder %s11, 1
    %p28 = por %p26, %p27
    %p29 = scmp.ne.s32.totalorder %s21, %s24
    %p30 = scmp.eq.s32.totalorder %s11, 0
    %p31 = por %p29, %p30
    %p32 = scmp.ne.s32.totalorder %s21, %s24
    %p33 = scmp.eq.s32.totalorder %s16, 1
    %p34 = por %p32, %p33
    %p35 = scmp.ne.s32.totalorder %s24, %s25
    %p36 = scmp.eq.s32.totalorder %s16, 0
    %p37 = por %p35, %p36
    %p38 = scmp.ne.s32.totalorder %s24, %s25
    %p39 = scmp.eq.s32.totalorder %s17, 1
    %p40 = por %p38, %p39
    %p42 = scmp.ne.s32.totalorder %s25, %s41
    %p43 = scmp.eq.s32.totalorder %s17, 0
    %p44 = por %p42, %p43
    %s46 = sadd.s32 %s45, 1
    %p49 = scmp.eq.s32.totalorder %s11, 1
    %p50 = scmp.ne.s32.totalorder %s45, %s47
    %p51 = scmp.eq.s32.totalorder %s11, 0
    %p52 = por %p50, %p51
    %p53 = scmp.ne.s32.totalorder %s45, %s47
    %p54 = scmp.eq.s32.totalorder %s16, 1
    %p55 = por %p53, %p54
    %p56 = scmp.ne.s32.totalorder %s47, %s48
    %p57 = scmp.eq.s32.totalorder %s16, 0
    %p58 = por %p56, %p57
    %p59 = scmp.ne.s32.totalorder %s47, %s48
    %p60 = scmp.eq.s32.totalorder %s17, 1
    %p61 = por %p59, %p60
    %p63 = scmp.ne.s32.totalorder %s48, %s62
    %p64 = scmp.eq.s32.totalorder %s17, 0
    %p65 = por %p63, %p64
    %s67 = sadd.s32 %s66, 1
    %p70 = scmp.eq.s32.totalorder %s11, 1
    %p71 = scmp.ne.s32.totalorder %s66, %s68
    %p72 = scmp.eq.s32.totalorder %s11, 0
    %p73 = por %p71, %p72
    %p74 = scmp.ne.s32.totalorder %s66, %s68
    %p75 = scmp.eq.s32.totalorder %s16, 1
    %p76 = por %p74, %p75
    %p77 = scmp.ne.s32.totalorder %s68, %s69
    %p78 = scmp.eq.s32.totalorder %s16, 0
    %p79 = por %p77, %p78
    %p80 = scmp.ne.s32.totalorder %s68, %s69
    %p81 = scmp.eq.s32.totalorder %s17, 1
    %p82 = por %p80, %p81
    %p84 = scmp.ne.s32.totalorder %s69, %s83
    %p85 = scmp.eq.s32.totalorder %s17, 0
    %p86 = por %p84, %p85
    %s87 = ssub.s32 %s11, %s18
    %p88 = scmp.eq.s32.totalorder %s87, 0
    %s90 = sadd.s32 %s89, 1
    %s91 = scalar_select %p88, %s89, %s90
    %p94 = pneg %p88
    %p95 = scmp.eq.s32.totalorder %s11, 1
    %p96 = por %p94, %p95
    %p97 = scmp.ne.s32.totalorder %s89, %s92
    %p98 = scmp.eq.s32.totalorder %s11, 0
    %p99 = por %p97, %p98
    %p100 = scmp.ne.s32.totalorder %s89, %s92
    %p101 = scmp.eq.s32.totalorder %s16, 1
    %p102 = por %p100, %p101
    %p103 = scmp.ne.s32.totalorder %s92, %s93
    %p104 = scmp.eq.s32.totalorder %s16, 0
    %p105 = por %p103, %p104
    %p106 = scmp.ne.s32.totalorder %s92, %s93
    %p107 = scmp.eq.s32.totalorder %s17, 1
    %p108 = por %p106, %p107
    %p110 = scmp.ne.s32.totalorder %s93, %s109
    %p111 = scmp.eq.s32.totalorder %s17, 0
    %p112 = por %p110, %p111
    %p113 = scmp.le.s32.totalorder 1, %s11
    %p114 = scmp.lt.s32.totalorder %s11, 3
    %p115 = pnand %p113, %p114
    %p116 = pneg %p115
    // Predicated region
    $region9: #{tpu_custom_call.1} parent=5 // pred_check
      _
    $region10: #{tpu_custom_call.1} parent=5 // pred_check_branch
      %118 = sbr.rel (%p115) target = $region12
    $region11: #{tpu_custom_call.1} parent=5 // pred_region
      %s119 = ssub.s32 %s11, 1
      // Predicated region
      $region13: #{tpu_custom_call.1} parent=11 // pred_check
        %p120 = pneg %p58
      $region14: #{tpu_custom_call.1} parent=11 // pred_check_branch
        %122 = sbr.rel (%p120) target = $region16
      $region15: #{tpu_custom_call.1} parent=11 // pred_region
        _
      $region16: #{tpu_custom_call.1} parent=11 // pred_fallthru
        _
      // Predicated region
      $region17: #{tpu_custom_call.1} parent=11 // pred_check
        %p123 = pneg %p79
      $region18: #{tpu_custom_call.1} parent=11 // pred_check_branch
        %125 = sbr.rel (%p123) target = $region20
      $region19: #{tpu_custom_call.1} parent=11 // pred_region
        _
      $region20: #{tpu_custom_call.1} parent=11 // pred_fallthru
        _
    $region12: #{tpu_custom_call.1} parent=5 // pred_fallthru
      _
    %p126 = scmp.lt.s32.totalorder %s11, 2
    // Predicated region
    $region21: #{tpu_custom_call.1} parent=5 // pred_check
      %p127 = pneg %p126
    $region22: #{tpu_custom_call.1} parent=5 // pred_check_branch
      %129 = sbr.rel (%p127) target = $region24
    $region23: #{tpu_custom_call.1} parent=5 // pred_region
      // Predicated region
      $region25: #{tpu_custom_call.1} parent=23 // pred_check
        %p130 = pneg %p31
      $region26: #{tpu_custom_call.1} parent=23 // pred_check_branch
        %132 = sbr.rel (%p130) target = $region28
      $region27: #{tpu_custom_call.1} parent=23 // pred_region
        %p133 = scmp.lt.s32.totalorder %s11, 1
        %s134 = scalar_select %p133, %s11, 1
        %s135 = smul.addr %s134, 8
        %s136 = scalar_lea.vmem %s0, %s135
      $region28: #{tpu_custom_call.1} parent=23 // pred_fallthru
        _
    $region24: #{tpu_custom_call.1} parent=5 // pred_fallthru
      _
    %p137 = scmp.le.s32.totalorder 1, %s11
    %p138 = scmp.lt.s32.totalorder %s11, 3
    %p139 = pnand %p137, %p138
    %p140 = pneg %p139
    // Predicated region
    $region29: #{tpu_custom_call.1} parent=5 // pred_check
      _
    $region30: #{tpu_custom_call.1} parent=5 // pred_check_branch
      %142 = sbr.rel (%p139) target = $region32
    $region31: #{tpu_custom_call.1} parent=5 // pred_region
      %s143 = ssub.s32 %s11, 1
      %p144 = scmp.lt.s32.totalorder %s16, 1
      %s145 = scalar_select %p144, %s16, 1
      %s146 = smul.addr %s145, 8
      %s147 = scalar_lea.vmem %s0, %s146
      %p148 = pneg %p37
      %p149 = pneg %p34
      %p150 = pneg %p58
      %p151 = pneg %p55
      %p152 = pneg %p79
      %p153 = pneg %p76
      %p154 = pneg %p105
      %p155 = pneg %p102
      %p156 = scmp.lt.s32.totalorder %s16, 1
      %s157 = scalar_select %p156, %s16, 1
      %s158 = smul.addr %s157, 8
      %s159 = scalar_lea.vmem %s3, %s158
      %p160 = scmp.lt.s32.totalorder %s16, 1
      %s161 = scalar_select %p160, %s16, 1
      %s162 = smul.addr %s161, 8
      %s163 = scalar_lea.vmem %s0, %s162
      %p164 = scmp.lt.s32.totalorder %s16, 1
      %s165 = scalar_select %p164, %s16, 1
      %s166 = smul.addr %s165, 8
      %s167 = scalar_lea.vmem %s3, %s166
      %v168 = vld [vmem:[%s163] sm:$0xff]
      %v169 = vld [vmem:[%s1] sm:$0xff]
      %v170 = vld [vmem:[%s1 + $0x8] sm:$0xff]
      %v171 = vld [vmem:[%s1 + $0x10] sm:$0xff]
      %v172 = vld [vmem:[%s1 + $0x18] sm:$0xff]
      %v173 = vld [vmem:[#allocation2] sm:$0x1]
      %v175 = vperm.slane %v173, 0
      %vm177 = vcmask 261120
      %v179 = vsel %vm177, %v168, 0
      %181 = vmatpush.msra.mxu0 0.0
      %182 = vmatpush.msra.mxu0 0.0
      %183 = vmatpush.msra.mxu0 0.0
      %184 = vmatpush.msra.mxu0 0.0
      %185 = vmatpush.msra.mxu0 0.0
      %186 = vmatpush.msra.mxu0 0.0
      %187 = vmatpush.msra.mxu0 0.0
      %188 = vmatpush.msra.mxu0 0.0
      %189 = vmatpush.msra.mxu0 0.0
      %190 = vmatpush.msra.mxu0 0.0
      %191 = vmatpush.msra.mxu0 0.0
      %192 = vmatpush.msra.mxu0 0.0
      %193 = vmatpush.msra.mxu0 %v172
      %194 = vmatpush.msra.mxu0 %v171
      %195 = vmatpush.msra.mxu0 %v170
      %196 = vmatpush.msra.mxu0 %v169
      %197 = vmatmul.f32.gmra.mxu0 %v179
      %v198 = vpop.f32.mrf.mxu0
      %v199 = vadd.f32 %v175, %v198
      %200 = vdwg.mxu0
      %vm201 = vcmask 7168
      %202 = vst.msk [vmem:[%s167] sm:$0xff] %vm201, %v199
      %p203 = scmp.lt.s32.totalorder %s16, 1
      %s204 = scalar_select %p203, %s16, 1
      %s205 = smul.addr %s204, 8
      %s206 = scalar_lea.vmem %s3, %s205
      // Predicated region
      $region33: #{tpu_custom_call.1} parent=31 // pred_check
        %p207 = pneg %p102
      $region34: #{tpu_custom_call.1} parent=31 // pred_check_branch
        %209 = sbr.rel (%p207) target = $region36
      $region35: #{tpu_custom_call.1} parent=31 // pred_region
        _
      $region36: #{tpu_custom_call.1} parent=31 // pred_fallthru
        _
    $region32: #{tpu_custom_call.1} parent=5 // pred_fallthru
      _
    %p210 = scmp.le.s32.totalorder 2, %s11
    // Predicated region
    $region37: #{tpu_custom_call.1} parent=5 // pred_check
      %p211 = pneg %p210
    $region38: #{tpu_custom_call.1} parent=5 // pred_check_branch
      %213 = sbr.rel (%p211) target = $region40
    $region39: #{tpu_custom_call.1} parent=5 // pred_region
      %s214 = ssub.s32 %s11, 2
      // Predicated region
      $region41: #{tpu_custom_call.1} parent=39 // pred_check
        %p215 = pneg %p108
      $region42: #{tpu_custom_call.1} parent=39 // pred_check_branch
        %217 = sbr.rel (%p215) target = $region44
      $region43: #{tpu_custom_call.1} parent=39 // pred_region
        %p218 = scmp.lt.s32.totalorder %s17, 1
        %s219 = scalar_select %p218, %s17, 1
        %s220 = smul.addr %s219, 8
        %s221 = scalar_lea.vmem %s3, %s220
      $region44: #{tpu_custom_call.1} parent=39 // pred_fallthru
        _
    $region40: #{tpu_custom_call.1} parent=5 // pred_fallthru
      _
  $region6: #{tpu_custom_call.1} parent=0 // loop_footer
    %s15 = sadd.s32 1, %s11
  $region7: #{tpu_custom_call.1} parent=0 // loop_footer_branch
    %10 = sbr.rel target = $region3
  $region8: #{tpu_custom_call.1} parent=0 // loop_exit
    _

</llo_original>
